<compile_context>
chip_gen: v5e
topology: v5e:2x2
jax: 0.10.0
libtpu: 0.0.40
codegen_flags: <defaults>
</compile_context>

<pallas_src>
import math

import jax
import jax.numpy as jnp
from jax.experimental import pallas as pl
from jax.experimental.pallas import tpu as pltpu


# ---------------------------------------------------------------------------
# Tiled matmul-plus-bias kernels:  O = A @ B + bias   (f32 accumulate)
# ---------------------------------------------------------------------------
def _matmul_bias_f32out_kernel(a_ref, b_ref, bias_ref, o_ref):
    """f32 output: accumulate directly into the resident output block."""
    k = pl.program_id(2)

    @pl.when(k == 0)
    def _():
        o_ref[...] = jnp.broadcast_to(bias_ref[...], o_ref.shape)

    # Operands hit the MXU in their native dtype (bf16 x bf16 single pass for
    # phase 2); accumulation is f32 via preferred_element_type.
    o_ref[...] += jnp.dot(a_ref[...], b_ref[...],
                          preferred_element_type=jnp.float32)


def _matmul_bias_castout_kernel(a_ref, b_ref, bias_ref, o_ref, acc_ref):
    """Narrow (bf16) output: f32 scratch accumulator, single cast at the end."""
    k = pl.program_id(2)

    @pl.when(k == 0)
    def _():
        acc_ref[...] = jnp.broadcast_to(bias_ref[...], acc_ref.shape)

    acc_ref[...] += jnp.dot(a_ref[...], b_ref[...],
                            preferred_element_type=jnp.float32)

    @pl.when(k == pl.num_programs(2) - 1)
    def _():
        o_ref[...] = acc_ref[...].astype(o_ref.dtype)


def _tiled_matmul(a, b, bias2d, *, tm, tn, tk, out_dtype=jnp.float32):
    """a: [M, K], b: [K, N], bias2d: [1, N]; M % tm == N % tn == K % tk == 0."""
    m, k_dim = a.shape
    _, n = b.shape
    g_i, g_j, g_k = m // tm, n // tn, k_dim // tk
    grid = (g_i, g_j, g_k)

    out_itemsize = jnp.dtype(out_dtype).itemsize
    flops = 2 * m * n * k_dim
    # A is re-streamed once per output-column tile, B once per output-row tile.
    bytes_accessed = (g_j * a.size * a.dtype.itemsize
                      + g_i * b.size * b.dtype.itemsize
                      + g_i * bias2d.size * bias2d.dtype.itemsize
                      + m * n * out_itemsize)

    f32_out = jnp.dtype(out_dtype) == jnp.dtype(jnp.float32)
    kernel = _matmul_bias_f32out_kernel if f32_out else _matmul_bias_castout_kernel
    scratch = [] if f32_out else [pltpu.VMEM((tm, tn), jnp.float32)]

    # NOTE: pipeline_mode=pl.Buffered(3) on the A spec is a possible few-%
    # win for the dominant stream; kept at default double-buffering here.
    return pl.pallas_call(
        kernel,
        out_shape=jax.ShapeDtypeStruct((m, n), out_dtype),
        grid_spec=pltpu.PrefetchScalarGridSpec(
            num_scalar_prefetch=0,
            grid=grid,
            in_specs=[
                pl.BlockSpec((tm, tk), lambda i, j, k: (i, k)),
                pl.BlockSpec((tk, tn), lambda i, j, k: (k, j)),
                pl.BlockSpec((1, tn), lambda i, j, k: (0, j)),
            ],
            out_specs=pl.BlockSpec((tm, tn), lambda i, j, k: (i, j)),
            scratch_shapes=scratch,
        ),
        compiler_params=pltpu.CompilerParams(
            dimension_semantics=("parallel", "parallel", "arbitrary"),
            vmem_limit_bytes=32 * 1024 * 1024),
        cost_estimate=pl.CostEstimate(
            flops=flops, transcendentals=0, bytes_accessed=bytes_accessed),
    )(a, b, bias2d)


# ---------------------------------------------------------------------------
# Padding helpers (lane-dense, tile-divisible)
# ---------------------------------------------------------------------------
def _round_up(x, m):
    return ((x + m - 1) // m) * m


def _pad_dim(d, tile_target):
    """Return (padded_dim, tile) with tile | padded_dim and tile % 128 == 0."""
    if d <= tile_target:
        p = _round_up(d, 128)
        return p, p
    return _round_up(d, tile_target), tile_target


def _pad2d(arr, rows, cols):
    r, c = arr.shape
    if r == rows and c == cols:
        return arr
    return jnp.pad(arr, ((0, rows - r), (0, cols - c)))


# ---------------------------------------------------------------------------
# GCN layer forward
# ---------------------------------------------------------------------------
def graph_convolution(x, adj_dense, weight, bias):
    """x: [N, F_in], adj_dense: [N, N], weight: [F_in, F_out], bias: [F_out]|None."""
    n, f_in = x.shape
    f_out = weight.shape[1]

    # Tile targets (multiples of 128).  N is both the row dim of A / output
    # and the contraction dim of A @ support, so it shares one target.
    n_pad, t_n = _pad_dim(n, 512)
    fin_pad, t_fin = _pad_dim(f_in, 512)
    fout_pad, t_fout = _pad_dim(f_out, 512)

    # If F_out collapses the j grid to a single tile, all megacore parallelism
    # comes from the row axis: split rows into 2 tiles when the padded N
    # allows an even 128-aligned split so both v7x TensorCores get work.
    t_rows = t_n
    if n_pad == t_n and n_pad % 256 == 0:
        t_rows = n_pad // 2

    x_p = _pad2d(x.astype(jnp.float32), n_pad, fin_pad)
    w_p = _pad2d(weight.astype(jnp.float32), fin_pad, fout_pad)
    # Cast BEFORE padding: avoids materializing an f32 n_pad^2 intermediate in
    # HBM just to re-read and cast it.  bf16 is exact for to_dense_adj's small
    # integer edge counts (<= 256); NOT exact for a normalized adjacency.
    a_p = _pad2d(adj_dense.astype(jnp.bfloat16), n_pad, n_pad)

    zero_bias = jnp.zeros((1, fout_pad), dtype=jnp.float32)
    if bias is None:
        bias_p = zero_bias
    else:
        bias_p = _pad2d(bias.reshape(1, f_out).astype(jnp.float32), 1, fout_pad)

    # Phase 1: support = X @ W  (computed exactly once, emitted as bf16 so the
    # dominant phase-2 matmul is a single-pass bf16 x bf16 MXU op).
    support = _tiled_matmul(x_p, w_p, zero_bias,
                            tm=t_rows, tn=t_fout, tk=t_fin,
                            out_dtype=jnp.bfloat16)

    # Phase 2: out = A @ support + bias  (dominant matmul; both HBM streams
    # are bf16, accumulation and output are f32 directly in the output block).
    out_p = _tiled_matmul(a_p, support, bias_p,
                          tm=t_rows, tn=t_fout, tk=t_n,
                          out_dtype=jnp.float32)

    return out_p[:n, :f_out]


def to_dense_adj(edge_index, num_nodes):
    """JAX equivalent of torch_geometric.utils.to_dense_adj(edge_index)[0]."""
    src, dst = edge_index[0], edge_index[1]
    a = jnp.zeros((num_nodes, num_nodes), dtype=jnp.float32)
    # duplicate edges accumulate, matching to_dense_adj's scatter-add semantics
    return a.at[src, dst].add(1.0)
    # TODO(synk): for genuinely sparse graphs, replace the dense A @ support
    # with a scalar-prefetch gather kernel instead of densifying A.


def init_params(key, in_features, out_features, bias=True):
    """Deterministic re-implementation of GraphConvolution.reset_parameters."""
    stdv = 1.0 / math.sqrt(out_features)
    kw, kb = jax.random.split(key)
    weight = jax.random.uniform(
        kw, (in_features, out_features), minval=-stdv, maxval=stdv,
        dtype=jnp.float32)
    b = None
    if bias:
        b = jax.random.uniform(
            kb, (out_features,), minval=-stdv, maxval=stdv, dtype=jnp.float32)
    return weight, b


if __name__ == "__main__":
    key = jax.random.PRNGKey(0)
    k_x, k_e, k_p = jax.random.split(key, 3)

    num_nodes = 16
    in_features = 32
    out_features = 64
    num_edges = 40

    # node features
    x = jax.random.normal(k_x, (num_nodes, in_features), dtype=jnp.float32)

    # deterministic edge_index [2, E] (COO, as torch_geometric would supply)
    edge_index = jax.random.randint(k_e, (2, num_edges), 0, num_nodes,
                                    dtype=jnp.int32)
    adj_dense = to_dense_adj(edge_index, num_nodes)

    weight, bias = init_params(k_p, in_features, out_features, bias=True)

    gcn = jax.jit(graph_convolution)
    out = gcn(x, adj_dense, weight, bias)
    out = jax.block_until_ready(out)

    # reference check in plain f32 JAX; support is bf16 inside the kernel
    # (f32 accumulation), so allow ~2^-8 relative slack.
    ref = adj_dense @ (x @ weight) + bias[None, :]
    assert out.shape == (num_nodes, out_features)
    assert jnp.allclose(out, ref, atol=2e-2, rtol=2e-2), (
        float(jnp.max(jnp.abs(out - ref))))

    print("KERNEL_OK")
</pallas_src>

<mosaic_0001>
module attributes {stable_mosaic.version = 11 : i64} {
  func.func @_matmul_bias_castout_kernel(%arg0: i32, %arg1: i32, %arg2: i32, %arg3: memref<128x128xf32, #tpu.memory_space<vmem>>, %arg4: memref<128x128xf32, #tpu.memory_space<vmem>>, %arg5: memref<1x128xf32, #tpu.memory_space<vmem>>, %arg6: memref<128x128xbf16, #tpu.memory_space<vmem>>, %arg7: memref<128x128xf32, #tpu.memory_space<vmem>>) attributes {dimension_semantics = [#tpu.dimension_semantics<parallel>, #tpu.dimension_semantics<parallel>, #tpu.dimension_semantics<arbitrary>], iteration_bounds = array<i64: 1, 1, 1>, scalar_prefetch = 0 : i64, scratch_operands = 1 : i64, tpu.core_type = #tpu.core_type<tc>, window_params = [{transform_indices = @transform_0, window_bounds = array<i64: 128, 128>}, {transform_indices = @transform_1, window_bounds = array<i64: 128, 128>}, {transform_indices = @transform_2, window_bounds = array<i64: 1, 128>}, {transform_indices = @transform_3, window_bounds = array<i64: 128, 128>}]} {
    %c0_i32 = arith.constant 0 : i32
    %0 = arith.cmpi eq, %arg2, %c0_i32 : i32
    %1 = arith.extui %0 : i1 to i32
    %c0_i32_0 = arith.constant 0 : i32
    %2 = arith.cmpi ne, %1, %c0_i32_0 : i32
    scf.if %2 {
      %c0_10 = arith.constant 0 : index
      %c0_11 = arith.constant 0 : index
      %12 = vector.load %arg5[%c0_10, %c0_11] : memref<1x128xf32, #tpu.memory_space<vmem>>, vector<1x128xf32>
      %13 = vector.shape_cast %12 : vector<1x128xf32> to vector<1x128xf32>
      %14 = vector.broadcast %13 : vector<1x128xf32> to vector<128x128xf32>
      %c0_12 = arith.constant 0 : index
      %c0_13 = arith.constant 0 : index
      %15 = vector.load %arg7[%c0_12, %c0_13] : memref<128x128xf32, #tpu.memory_space<vmem>>, vector<128x128xf32>
      tpu.vector_store %arg7[%c0_12, %c0_13], %14 {strides = array<i32>} : memref<128x128xf32, #tpu.memory_space<vmem>>, vector<128x128xf32>,
    } else {
    }
    %c0 = arith.constant 0 : index
    %c0_1 = arith.constant 0 : index
    %3 = vector.load %arg7[%c0, %c0_1] : memref<128x128xf32, #tpu.memory_space<vmem>>, vector<128x128xf32>
    %c0_2 = arith.constant 0 : index
    %c0_3 = arith.constant 0 : index
    %4 = vector.load %arg3[%c0_2, %c0_3] : memref<128x128xf32, #tpu.memory_space<vmem>>, vector<128x128xf32>
    %c0_4 = arith.constant 0 : index
    %c0_5 = arith.constant 0 : index
    %5 = vector.load %arg4[%c0_4, %c0_5] : memref<128x128xf32, #tpu.memory_space<vmem>>, vector<128x128xf32>
    %cst = arith.constant dense<0.000000e+00> : vector<128x128xf32>
    %6 = tpu.matmul %4, %5, %cst {dimension_numbers = #tpu.dot_dimension_numbers<[1], [0], [0], [1], [0, 0, 1, 1], [], []>} : vector<128x128xf32>, vector<128x128xf32>, vector<128x128xf32> -> vector<128x128xf32>
    %7 = arith.addf %3, %6 : vector<128x128xf32>
    %c0_6 = arith.constant 0 : index
    %c0_7 = arith.constant 0 : index
    %8 = vector.load %arg7[%c0_6, %c0_7] : memref<128x128xf32, #tpu.memory_space<vmem>>, vector<128x128xf32>
    tpu.vector_store %arg7[%c0_6, %c0_7], %7 {strides = array<i32>} : memref<128x128xf32, #tpu.memory_space<vmem>>, vector<128x128xf32>,
    %c0_i32_8 = arith.constant 0 : i32
    %9 = arith.cmpi eq, %arg2, %c0_i32_8 : i32
    %10 = arith.extui %9 : i1 to i32
    %c0_i32_9 = arith.constant 0 : i32
    %11 = arith.cmpi ne, %10, %c0_i32_9 : i32
    scf.if %11 {
      %c0_10 = arith.constant 0 : index
      %c0_11 = arith.constant 0 : index
      %12 = vector.load %arg7[%c0_10, %c0_11] : memref<128x128xf32, #tpu.memory_space<vmem>>, vector<128x128xf32>
      %13 = arith.truncf %12 : vector<128x128xf32> to vector<128x128xbf16>
      %c0_12 = arith.constant 0 : index
      %c0_13 = arith.constant 0 : index
      %14 = vector.load %arg6[%c0_12, %c0_13] : memref<128x128xbf16, #tpu.memory_space<vmem>>, vector<128x128xbf16>
      tpu.vector_store %arg6[%c0_12, %c0_13], %13 {strides = array<i32>} : memref<128x128xbf16, #tpu.memory_space<vmem>>, vector<128x128xbf16>,
    } else {
    }
    return
  }
  func.func @transform_0(%arg0: i32, %arg1: i32, %arg2: i32) -> (i32, i32) {
    %c0_i32 = arith.constant 0 : i32
    return %arg0, %arg2 : i32, i32
  }
  func.func @transform_1(%arg0: i32, %arg1: i32, %arg2: i32) -> (i32, i32) {
    %c0_i32 = arith.constant 0 : i32
    return %arg2, %arg1 : i32, i32
  }
  func.func @transform_2(%arg0: i32, %arg1: i32, %arg2: i32) -> (i32, i32) {
    %c0_i32 = arith.constant 0 : i32
    %c0_i32_0 = arith.constant 0 : i32
    return %c0_i32, %arg1 : i32, i32
  }
  func.func @transform_3(%arg0: i32, %arg1: i32, %arg2: i32) -> (i32, i32) {
    %c0_i32 = arith.constant 0 : i32
    return %arg0, %arg1 : i32, i32
  }
}

module attributes {stable_mosaic.version = 11 : i64} {
  func.func @_matmul_bias_f32out_kernel(%arg0: i32, %arg1: i32, %arg2: i32, %arg3: memref<128x128xbf16, #tpu.memory_space<vmem>>, %arg4: memref<128x128xbf16, #tpu.memory_space<vmem>>, %arg5: memref<1x128xf32, #tpu.memory_space<vmem>>, %arg6: memref<128x128xf32, #tpu.memory_space<vmem>>) attributes {dimension_semantics = [#tpu.dimension_semantics<parallel>, #tpu.dimension_semantics<parallel>, #tpu.dimension_semantics<arbitrary>], iteration_bounds = array<i64: 1, 1, 1>, scalar_prefetch = 0 : i64, scratch_operands = 0 : i64, tpu.core_type = #tpu.core_type<tc>, window_params = [{transform_indices = @transform_0, window_bounds = array<i64: 128, 128>}, {transform_indices = @transform_1, window_bounds = array<i64: 128, 128>}, {transform_indices = @transform_2, window_bounds = array<i64: 1, 128>}, {transform_indices = @transform_3, window_bounds = array<i64: 128, 128>}]} {
    %c0_i32 = arith.constant 0 : i32
    %0 = arith.cmpi eq, %arg2, %c0_i32 : i32
    %1 = arith.extui %0 : i1 to i32
    %c0_i32_0 = arith.constant 0 : i32
    %2 = arith.cmpi ne, %1, %c0_i32_0 : i32
    scf.if %2 {
      %c0_8 = arith.constant 0 : index
      %c0_9 = arith.constant 0 : index
      %9 = vector.load %arg5[%c0_8, %c0_9] : memref<1x128xf32, #tpu.memory_space<vmem>>, vector<1x128xf32>
      %10 = vector.shape_cast %9 : vector<1x128xf32> to vector<1x128xf32>
      %11 = vector.broadcast %10 : vector<1x128xf32> to vector<128x128xf32>
      %c0_10 = arith.constant 0 : index
      %c0_11 = arith.constant 0 : index
      %12 = vector.load %arg6[%c0_10, %c0_11] : memref<128x128xf32, #tpu.memory_space<vmem>>, vector<128x128xf32>
      tpu.vector_store %arg6[%c0_10, %c0_11], %11 {strides = array<i32>} : memref<128x128xf32, #tpu.memory_space<vmem>>, vector<128x128xf32>,
    } else {
    }
    %c0 = arith.constant 0 : index
    %c0_1 = arith.constant 0 : index
    %3 = vector.load %arg6[%c0, %c0_1] : memref<128x128xf32, #tpu.memory_space<vmem>>, vector<128x128xf32>
    %c0_2 = arith.constant 0 : index
    %c0_3 = arith.constant 0 : index
    %4 = vector.load %arg3[%c0_2, %c0_3] : memref<128x128xbf16, #tpu.memory_space<vmem>>, vector<128x128xbf16>
    %c0_4 = arith.constant 0 : index
    %c0_5 = arith.constant 0 : index
    %5 = vector.load %arg4[%c0_4, %c0_5] : memref<128x128xbf16, #tpu.memory_space<vmem>>, vector<128x128xbf16>
    %cst = arith.constant dense<0.000000e+00> : vector<128x128xf32>
    %6 = tpu.matmul %4, %5, %cst {dimension_numbers = #tpu.dot_dimension_numbers<[1], [0], [0], [1], [0, 0, 1, 1], [], []>} : vector<128x128xbf16>, vector<128x128xbf16>, vector<128x128xf32> -> vector<128x128xf32>
    %7 = arith.addf %3, %6 : vector<128x128xf32>
    %c0_6 = arith.constant 0 : index
    %c0_7 = arith.constant 0 : index
    %8 = vector.load %arg6[%c0_6, %c0_7] : memref<128x128xf32, #tpu.memory_space<vmem>>, vector<128x128xf32>
    tpu.vector_store %arg6[%c0_6, %c0_7], %7 {strides = array<i32>} : memref<128x128xf32, #tpu.memory_space<vmem>>, vector<128x128xf32>,
    return
  }
  func.func @transform_0(%arg0: i32, %arg1: i32, %arg2: i32) -> (i32, i32) {
    %c0_i32 = arith.constant 0 : i32
    return %arg0, %arg2 : i32, i32
  }
  func.func @transform_1(%arg0: i32, %arg1: i32, %arg2: i32) -> (i32, i32) {
    %c0_i32 = arith.constant 0 : i32
    return %arg2, %arg1 : i32, i32
  }
  func.func @transform_2(%arg0: i32, %arg1: i32, %arg2: i32) -> (i32, i32) {
    %c0_i32 = arith.constant 0 : i32
    %c0_i32_0 = arith.constant 0 : i32
    return %c0_i32, %arg1 : i32, i32
  }
  func.func @transform_3(%arg0: i32, %arg1: i32, %arg2: i32) -> (i32, i32) {
    %c0_i32 = arith.constant 0 : i32
    return %arg0, %arg1 : i32, i32
  }
}

</mosaic_0001>

<llo_original>
// kernel: graph_convolution.2
$region0: #{graph_convolution.2}
  #allocation0 [shape = 'u32[]', space=smem, size = 0x4, offset = 0x4, fixed_abs, tag = 'smem constant byte address 0x4 - core index']
  #allocation1 [shape = 'u32[72,128]{1,0:T(1,128)}', space=vmem, size = 0x9000, scoped, tag = 'internal scratch']
  #allocation2 [shape = 'f32[128,128]{1,0:T(8,128)}', space=vmem, size = 0x10000, scoped, tag = 'scratch operand']
  %s0 = inlined_call_operand.vmem [shape: f32[128,128], index: 0, kind: input, shape index: {}]
  %s1 = inlined_call_operand.vmem [shape: f32[128,128], index: 1, kind: input, shape index: {}]
  %s2 = inlined_call_operand.vmem [shape: f32[1,128], index: 2, kind: input, shape index: {}]
  %s3 = inlined_call_operand.vmem [shape: bf16[128,128], index: 3, kind: output, shape index: {}]
  %s4 = sld [smem:[#allocation0]]
  $region30: #{graph_convolution.2} parent=0
    _
  %s6 = ssub.s32 1, %s4
  %s7 = scalar_select 0, %s6, %s4
  // Predicated region
  $region2: #{graph_convolution.2} parent=0 // pred_check
    _
  $region3: #{graph_convolution.2} parent=0 // pred_check_branch
    %9 = sbr.rel (0) target = $region5
  $region4: #{graph_convolution.2} parent=0 // pred_region
    _
  $region5: #{graph_convolution.2} parent=0 // pred_fallthru
    _
  // Predicated region
  $region6: #{graph_convolution.2} parent=0 // pred_check
    _
  $region7: #{graph_convolution.2} parent=0 // pred_check_branch
    %11 = sbr.rel (0) target = $region9
  $region8: #{graph_convolution.2} parent=0 // pred_region
    _
  $region9: #{graph_convolution.2} parent=0 // pred_fallthru
    _
  // Predicated region
  $region10: #{graph_convolution.2} parent=0 // pred_check
    _
  $region11: #{graph_convolution.2} parent=0 // pred_check_branch
    %13 = sbr.rel (0) target = $region13
  $region12: #{graph_convolution.2} parent=0 // pred_region
    _
  $region13: #{graph_convolution.2} parent=0 // pred_fallthru
    _
  %p14 = scmp.eq.s32.totalorder 0, 0
  // Predicated region
  $region14: #{graph_convolution.2} parent=0 // pred_check
    %p15 = pneg %p14
  $region15: #{graph_convolution.2} parent=0 // pred_check_branch
    %17 = sbr.rel (%p15) target = $region17
  $region16: #{graph_convolution.2} parent=0 // pred_region
    %v18 = vld [vmem:[%s2] sm:$0x1]
    %v20 = vperm.slane %v18, 0
    %22 = vst [vmem:[#allocation2] sm:$0xff] %v20
    %23 = vst [vmem:[#allocation2 + $0x8] sm:$0xff] %v20
    %24 = vst [vmem:[#allocation2 + $0x10] sm:$0xff] %v20
    %25 = vst [vmem:[#allocation2 + $0x18] sm:$0xff] %v20
    %26 = vst [vmem:[#allocation2 + $0x20] sm:$0xff] %v20
    %27 = vst [vmem:[#allocation2 + $0x28] sm:$0xff] %v20
    %28 = vst [vmem:[#allocation2 + $0x30] sm:$0xff] %v20
    %29 = vst [vmem:[#allocation2 + $0x38] sm:$0xff] %v20
    %30 = vst [vmem:[#allocation2 + $0x40] sm:$0xff] %v20
    %31 = vst [vmem:[#allocation2 + $0x48] sm:$0xff] %v20
    %32 = vst [vmem:[#allocation2 + $0x50] sm:$0xff] %v20
    %33 = vst [vmem:[#allocation2 + $0x58] sm:$0xff] %v20
    %34 = vst [vmem:[#allocation2 + $0x60] sm:$0xff] %v20
    %35 = vst [vmem:[#allocation2 + $0x68] sm:$0xff] %v20
    %36 = vst [vmem:[#allocation2 + $0x70] sm:$0xff] %v20
    %37 = vst [vmem:[#allocation2 + $0x78] sm:$0xff] %v20
  $region17: #{graph_convolution.2} parent=0 // pred_fallthru
    _
  %v38 = vld [vmem:[#allocation2] sm:$0xff]
  %v39 = vld [vmem:[#allocation2 + $0x8] sm:$0xff]
  %v40 = vld [vmem:[#allocation2 + $0x10] sm:$0xff]
  %v41 = vld [vmem:[#allocation2 + $0x18] sm:$0xff]
  %v42 = vld [vmem:[#allocation2 + $0x20] sm:$0xff]
  %v43 = vld [vmem:[#allocation2 + $0x28] sm:$0xff]
  %v44 = vld [vmem:[#allocation2 + $0x30] sm:$0xff]
  %v45 = vld [vmem:[#allocation2 + $0x38] sm:$0xff]
  %v46 = vld [vmem:[#allocation2 + $0x40] sm:$0xff]
  %v47 = vld [vmem:[#allocation2 + $0x48] sm:$0xff]
  %v48 = vld [vmem:[#allocation2 + $0x50] sm:$0xff]
  %v49 = vld [vmem:[#allocation2 + $0x58] sm:$0xff]
  %v50 = vld [vmem:[#allocation2 + $0x60] sm:$0xff]
  %v51 = vld [vmem:[#allocation2 + $0x68] sm:$0xff]
  %v52 = vld [vmem:[#allocation2 + $0x70] sm:$0xff]
  %v53 = vld [vmem:[#allocation2 + $0x78] sm:$0xff]
  %v54 = vld [vmem:[%s0] sm:$0xff]
  %v55 = vld [vmem:[%s0 + $0x8] sm:$0xff]
  %v56 = vld [vmem:[%s0 + $0x10] sm:$0xff]
  %v57 = vld [vmem:[%s0 + $0x18] sm:$0xff]
  %v58 = vld [vmem:[%s0 + $0x20] sm:$0xff]
  %v59 = vld [vmem:[%s0 + $0x28] sm:$0xff]
  %v60 = vld [vmem:[%s0 + $0x30] sm:$0xff]
  %v61 = vld [vmem:[%s0 + $0x38] sm:$0xff]
  %v62 = vld [vmem:[%s0 + $0x40] sm:$0xff]
  %v63 = vld [vmem:[%s0 + $0x48] sm:$0xff]
  %v64 = vld [vmem:[%s0 + $0x50] sm:$0xff]
  %v65 = vld [vmem:[%s0 + $0x58] sm:$0xff]
  %v66 = vld [vmem:[%s0 + $0x60] sm:$0xff]
  %v67 = vld [vmem:[%s0 + $0x68] sm:$0xff]
  %v68 = vld [vmem:[%s0 + $0x70] sm:$0xff]
  %v69 = vld [vmem:[%s0 + $0x78] sm:$0xff]
  %v70 = vld [vmem:[%s1] sm:$0xff]
  %v71 = vld [vmem:[%s1 + $0x8] sm:$0xff]
  %v72 = vld [vmem:[%s1 + $0x10] sm:$0xff]
  %v73 = vld [vmem:[%s1 + $0x18] sm:$0xff]
  %v74 = vld [vmem:[%s1 + $0x20] sm:$0xff]
  %v75 = vld [vmem:[%s1 + $0x28] sm:$0xff]
  %v76 = vld [vmem:[%s1 + $0x30] sm:$0xff]
  %v77 = vld [vmem:[%s1 + $0x38] sm:$0xff]
  %v78 = vld [vmem:[%s1 + $0x40] sm:$0xff]
  %v79 = vld [vmem:[%s1 + $0x48] sm:$0xff]
  %v80 = vld [vmem:[%s1 + $0x50] sm:$0xff]
  %v81 = vld [vmem:[%s1 + $0x58] sm:$0xff]
  %v82 = vld [vmem:[%s1 + $0x60] sm:$0xff]
  %v83 = vld [vmem:[%s1 + $0x68] sm:$0xff]
  %v84 = vld [vmem:[%s1 + $0x70] sm:$0xff]
  %v85 = vld [vmem:[%s1 + $0x78] sm:$0xff]
  %86 = vmatpush.msra.mxu0 %v85
  %87 = vmatpush.msra.mxu0 %v84
  %88 = vmatpush.msra.mxu0 %v83
  %89 = vmatpush.msra.mxu0 %v82
  %90 = vmatpush.msra.mxu0 %v81
  %91 = vmatpush.msra.mxu0 %v80
  %92 = vmatpush.msra.mxu0 %v79
  %93 = vmatpush.msra.mxu0 %v78
  %94 = vmatpush.msra.mxu0 %v77
  %95 = vmatpush.msra.mxu0 %v76
  %96 = vmatpush.msra.mxu0 %v75
  %97 = vmatpush.msra.mxu0 %v74
  %98 = vmatpush.msra.mxu0 %v73
  %99 = vmatpush.msra.mxu0 %v72
  %100 = vmatpush.msra.mxu0 %v71
  %101 = vmatpush.msra.mxu0 %v70
  %102 = vmatmul.f32.gmra.mxu0 %v54
  %v103 = vpop.f32.mrf.mxu0
  %v104 = vadd.f32 0.0, %v103
  %105 = vmatmul.f32.gmra.mxu0 %v55
  %v106 = vpop.f32.mrf.mxu0
  %v107 = vadd.f32 0.0, %v106
  %108 = vmatmul.f32.gmra.mxu0 %v56
  %v109 = vpop.f32.mrf.mxu0
  %v110 = vadd.f32 0.0, %v109
  %111 = vmatmul.f32.gmra.mxu0 %v57
  %v112 = vpop.f32.mrf.mxu0
  %v113 = vadd.f32 0.0, %v112
  %114 = vmatmul.f32.gmra.mxu0 %v58
  %v115 = vpop.f32.mrf.mxu0
  %v116 = vadd.f32 0.0, %v115
  %117 = vmatmul.f32.gmra.mxu0 %v59
  %v118 = vpop.f32.mrf.mxu0
  %v119 = vadd.f32 0.0, %v118
  %120 = vmatmul.f32.gmra.mxu0 %v60
  %v121 = vpop.f32.mrf.mxu0
  %v122 = vadd.f32 0.0, %v121
  %123 = vmatmul.f32.gmra.mxu0 %v61
  %v124 = vpop.f32.mrf.mxu0
  %v125 = vadd.f32 0.0, %v124
  %126 = vmatmul.f32.gmra.mxu0 %v62
  %v127 = vpop.f32.mrf.mxu0
  %v128 = vadd.f32 0.0, %v127
  %129 = vmatmul.f32.gmra.mxu0 %v63
  %v130 = vpop.f32.mrf.mxu0
  %v131 = vadd.f32 0.0, %v130
  %132 = vmatmul.f32.gmra.mxu0 %v64
  %v133 = vpop.f32.mrf.mxu0
  %v134 = vadd.f32 0.0, %v133
  %135 = vmatmul.f32.gmra.mxu0 %v65
  %v136 = vpop.f32.mrf.mxu0
  %v137 = vadd.f32 0.0, %v136
  %138 = vmatmul.f32.gmra.mxu0 %v66
  %v139 = vpop.f32.mrf.mxu0
  %v140 = vadd.f32 0.0, %v139
  %141 = vmatmul.f32.gmra.mxu0 %v67
  %v142 = vpop.f32.mrf.mxu0
  %v143 = vadd.f32 0.0, %v142
  %144 = vmatmul.f32.gmra.mxu0 %v68
  %v145 = vpop.f32.mrf.mxu0
  %v146 = vadd.f32 0.0, %v145
  %147 = vmatmul.f32.gmra.mxu0 %v69
  %v148 = vpop.f32.mrf.mxu0
  %v149 = vadd.f32 0.0, %v148
  %150 = vdwg.mxu0
  %v151 = vadd.f32 %v38, %v104
  %v152 = vadd.f32 %v39, %v107
  %v153 = vadd.f32 %v40, %v110
  %v154 = vadd.f32 %v41, %v113
  %v155 = vadd.f32 %v42, %v116
  %v156 = vadd.f32 %v43, %v119
  %v157 = vadd.f32 %v44, %v122
  %v158 = vadd.f32 %v45, %v125
  %v159 = vadd.f32 %v46, %v128
  %v160 = vadd.f32 %v47, %v131
  %v161 = vadd.f32 %v48, %v134
  %v162 = vadd.f32 %v49, %v137
  %v163 = vadd.f32 %v50, %v140
  %v164 = vadd.f32 %v51, %v143
  %v165 = vadd.f32 %v52, %v146
  %v166 = vadd.f32 %v53, %v149
  %167 = vst [vmem:[#allocation2] sm:$0xff] %v151
  %168 = vst [vmem:[#allocation2 + $0x8] sm:$0xff] %v152
  %169 = vst [vmem:[#allocation2 + $0x10] sm:$0xff] %v153
  %170 = vst [vmem:[#allocation2 + $0x18] sm:$0xff] %v154
  %171 = vst [vmem:[#allocation2 + $0x20] sm:$0xff] %v155
  %172 = vst [vmem:[#allocation2 + $0x28] sm:$0xff] %v156
  %173 = vst [vmem:[#allocation2 + $0x30] sm:$0xff] %v157
  %174 = vst [vmem:[#allocation2 + $0x38] sm:$0xff] %v158
  %175 = vst [vmem:[#allocation2 + $0x40] sm:$0xff] %v159
  %176 = vst [vmem:[#allocation2 + $0x48] sm:$0xff] %v160
  %177 = vst [vmem:[#allocation2 + $0x50] sm:$0xff] %v161
  %178 = vst [vmem:[#allocation2 + $0x58] sm:$0xff] %v162
  %179 = vst [vmem:[#allocation2 + $0x60] sm:$0xff] %v163
  %180 = vst [vmem:[#allocation2 + $0x68] sm:$0xff] %v164
  %181 = vst [vmem:[#allocation2 + $0x70] sm:$0xff] %v165
  %182 = vst [vmem:[#allocation2 + $0x78] sm:$0xff] %v166
  // Predicated region
  $region18: #{graph_convolution.2} parent=0 // pred_check
    %p183 = pneg %p14
  $region19: #{graph_convolution.2} parent=0 // pred_check_branch
    %185 = sbr.rel (%p183) target = $region21
  $region20: #{graph_convolution.2} parent=0 // pred_region
    %v186 = vld [vmem:[#allocation2] sm:$0xff]
    %v187 = vld [vmem:[#allocation2 + $0x8] sm:$0xff]
    %v188 = vld [vmem:[#allocation2 + $0x10] sm:$0xff]
    %v189 = vld [vmem:[#allocation2 + $0x18] sm:$0xff]
    %v190 = vld [vmem:[#allocation2 + $0x20] sm:$0xff]
    %v191 = vld [vmem:[#allocation2 + $0x28] sm:$0xff]
    %v192 = vld [vmem:[#allocation2 + $0x30] sm:$0xff]
    %v193 = vld [vmem:[#allocation2 + $0x38] sm:$0xff]
    %v194 = vld [vmem:[#allocation2 + $0x40] sm:$0xff]
    %v195 = vld [vmem:[#allocation2 + $0x48] sm:$0xff]
    %v196 = vld [vmem:[#allocation2 + $0x50] sm:$0xff]
    %v197 = vld [vmem:[#allocation2 + $0x58] sm:$0xff]
    %v198 = vld [vmem:[#allocation2 + $0x60] sm:$0xff]
    %v199 = vld [vmem:[#allocation2 + $0x68] sm:$0xff]
    %v200 = vld [vmem:[#allocation2 + $0x70] sm:$0xff]
    %v201 = vld [vmem:[#allocation2 + $0x78] sm:$0xff]
    %v202 = vpack.c.bf16 %v186, %v186
    %v203 = vpack.c.bf16 %v187, %v187
    %v204 = vpack.c.bf16 %v188, %v188
    %v205 = vpack.c.bf16 %v189, %v189
    %v206 = vpack.c.bf16 %v190, %v190
    %v207 = vpack.c.bf16 %v191, %v191
    %v208 = vpack.c.bf16 %v192, %v192
    %v209 = vpack.c.bf16 %v193, %v193
    %v210 = vpack.c.bf16 %v194, %v194
    %v211 = vpack.c.bf16 %v195, %v195
    %v212 = vpack.c.bf16 %v196, %v196
    %v213 = vpack.c.bf16 %v197, %v197
    %v214 = vpack.c.bf16 %v198, %v198
    %v215 = vpack.c.bf16 %v199, %v199
    %v216 = vpack.c.bf16 %v200, %v200
    %v217 = vpack.c.bf16 %v201, %v201
    %218 = vst [vmem:[%s3] sm:$0xf] %v202
    %219 = vst [vmem:[%s3 + $0x4] sm:$0xf] %v203
    %220 = vst [vmem:[%s3 + $0x8] sm:$0xf] %v204
    %221 = vst [vmem:[%s3 + $0xc] sm:$0xf] %v205
    %222 = vst [vmem:[%s3 + $0x10] sm:$0xf] %v206
    %223 = vst [vmem:[%s3 + $0x14] sm:$0xf] %v207
    %224 = vst [vmem:[%s3 + $0x18] sm:$0xf] %v208
    %225 = vst [vmem:[%s3 + $0x1c] sm:$0xf] %v209
    %226 = vst [vmem:[%s3 + $0x20] sm:$0xf] %v210
    %227 = vst [vmem:[%s3 + $0x24] sm:$0xf] %v211
    %228 = vst [vmem:[%s3 + $0x28] sm:$0xf] %v212
    %229 = vst [vmem:[%s3 + $0x2c] sm:$0xf] %v213
    %230 = vst [vmem:[%s3 + $0x30] sm:$0xf] %v214
    %231 = vst [vmem:[%s3 + $0x34] sm:$0xf] %v215
    %232 = vst [vmem:[%s3 + $0x38] sm:$0xf] %v216
    %233 = vst [vmem:[%s3 + $0x3c] sm:$0xf] %v217
  $region21: #{graph_convolution.2} parent=0 // pred_fallthru
    _
  // Predicated region
  $region22: #{graph_convolution.2} parent=0 // pred_check
    _
  $region23: #{graph_convolution.2} parent=0 // pred_check_branch
    %235 = sbr.rel (0) target = $region25
  $region24: #{graph_convolution.2} parent=0 // pred_region
    _
  $region25: #{graph_convolution.2} parent=0 // pred_fallthru
    _
  // Predicated region
  $region26: #{graph_convolution.2} parent=0 // pred_check
    _
  $region27: #{graph_convolution.2} parent=0 // pred_check_branch
    %237 = sbr.rel (0) target = $region29
  $region28: #{graph_convolution.2} parent=0 // pred_region
    _
  $region29: #{graph_convolution.2} parent=0 // pred_fallthru
    _

// kernel: graph_convolution.3
$region0: #{graph_convolution.3}
  #allocation0 [shape = 'u32[]', space=smem, size = 0x4, offset = 0x4, fixed_abs, tag = 'smem constant byte address 0x4 - core index']
  #allocation1 [shape = 'u32[72,128]{1,0:T(1,128)}', space=vmem, size = 0x9000, scoped, tag = 'internal scratch']
  %s0 = inlined_call_operand.vmem [shape: bf16[128,128], index: 0, kind: input, shape index: {}]
  %s1 = inlined_call_operand.vmem [shape: bf16[128,128], index: 1, kind: input, shape index: {}]
  %s2 = inlined_call_operand.vmem [shape: f32[1,128], index: 2, kind: input, shape index: {}]
  %s3 = inlined_call_operand.vmem [shape: f32[128,128], index: 3, kind: output, shape index: {}]
  %s4 = sld [smem:[#allocation0]]
  $region26: #{graph_convolution.3} parent=0
    _
  %s6 = ssub.s32 1, %s4
  %s7 = scalar_select 0, %s6, %s4
  // Predicated region
  $region2: #{graph_convolution.3} parent=0 // pred_check
    _
  $region3: #{graph_convolution.3} parent=0 // pred_check_branch
    %9 = sbr.rel (0) target = $region5
  $region4: #{graph_convolution.3} parent=0 // pred_region
    _
  $region5: #{graph_convolution.3} parent=0 // pred_fallthru
    _
  // Predicated region
  $region6: #{graph_convolution.3} parent=0 // pred_check
    _
  $region7: #{graph_convolution.3} parent=0 // pred_check_branch
    %11 = sbr.rel (0) target = $region9
  $region8: #{graph_convolution.3} parent=0 // pred_region
    _
  $region9: #{graph_convolution.3} parent=0 // pred_fallthru
    _
  // Predicated region
  $region10: #{graph_convolution.3} parent=0 // pred_check
    _
  $region11: #{graph_convolution.3} parent=0 // pred_check_branch
    %13 = sbr.rel (0) target = $region13
  $region12: #{graph_convolution.3} parent=0 // pred_region
    _
  $region13: #{graph_convolution.3} parent=0 // pred_fallthru
    _
  %p14 = scmp.eq.s32.totalorder 0, 0
  // Predicated region
  $region14: #{graph_convolution.3} parent=0 // pred_check
    %p15 = pneg %p14
  $region15: #{graph_convolution.3} parent=0 // pred_check_branch
    %17 = sbr.rel (%p15) target = $region17
  $region16: #{graph_convolution.3} parent=0 // pred_region
    %v18 = vld [vmem:[%s2] sm:$0x1]
    %v20 = vperm.slane %v18, 0
    %22 = vst [vmem:[%s3] sm:$0xff] %v20
    %23 = vst [vmem:[%s3 + $0x8] sm:$0xff] %v20
    %24 = vst [vmem:[%s3 + $0x10] sm:$0xff] %v20
    %25 = vst [vmem:[%s3 + $0x18] sm:$0xff] %v20
    %26 = vst [vmem:[%s3 + $0x20] sm:$0xff] %v20
    %27 = vst [vmem:[%s3 + $0x28] sm:$0xff] %v20
    %28 = vst [vmem:[%s3 + $0x30] sm:$0xff] %v20
    %29 = vst [vmem:[%s3 + $0x38] sm:$0xff] %v20
    %30 = vst [vmem:[%s3 + $0x40] sm:$0xff] %v20
    %31 = vst [vmem:[%s3 + $0x48] sm:$0xff] %v20
    %32 = vst [vmem:[%s3 + $0x50] sm:$0xff] %v20
    %33 = vst [vmem:[%s3 + $0x58] sm:$0xff] %v20
    %34 = vst [vmem:[%s3 + $0x60] sm:$0xff] %v20
    %35 = vst [vmem:[%s3 + $0x68] sm:$0xff] %v20
    %36 = vst [vmem:[%s3 + $0x70] sm:$0xff] %v20
    %37 = vst [vmem:[%s3 + $0x78] sm:$0xff] %v20
  $region17: #{graph_convolution.3} parent=0 // pred_fallthru
    _
  %v38 = vld [vmem:[%s3] sm:$0xff]
  %v39 = vld [vmem:[%s3 + $0x8] sm:$0xff]
  %v40 = vld [vmem:[%s3 + $0x10] sm:$0xff]
  %v41 = vld [vmem:[%s3 + $0x18] sm:$0xff]
  %v42 = vld [vmem:[%s3 + $0x20] sm:$0xff]
  %v43 = vld [vmem:[%s3 + $0x28] sm:$0xff]
  %v44 = vld [vmem:[%s3 + $0x30] sm:$0xff]
  %v45 = vld [vmem:[%s3 + $0x38] sm:$0xff]
  %v46 = vld [vmem:[%s3 + $0x40] sm:$0xff]
  %v47 = vld [vmem:[%s3 + $0x48] sm:$0xff]
  %v48 = vld [vmem:[%s3 + $0x50] sm:$0xff]
  %v49 = vld [vmem:[%s3 + $0x58] sm:$0xff]
  %v50 = vld [vmem:[%s3 + $0x60] sm:$0xff]
  %v51 = vld [vmem:[%s3 + $0x68] sm:$0xff]
  %v52 = vld [vmem:[%s3 + $0x70] sm:$0xff]
  %v53 = vld [vmem:[%s3 + $0x78] sm:$0xff]
  %v54 = vld [vmem:[%s0] sm:$0xf]
  %v55 = vld [vmem:[%s0 + $0x4] sm:$0xf]
  %v56 = vld [vmem:[%s0 + $0x8] sm:$0xf]
  %v57 = vld [vmem:[%s0 + $0xc] sm:$0xf]
  %v58 = vld [vmem:[%s0 + $0x10] sm:$0xf]
  %v59 = vld [vmem:[%s0 + $0x14] sm:$0xf]
  %v60 = vld [vmem:[%s0 + $0x18] sm:$0xf]
  %v61 = vld [vmem:[%s0 + $0x1c] sm:$0xf]
  %v62 = vld [vmem:[%s0 + $0x20] sm:$0xf]
  %v63 = vld [vmem:[%s0 + $0x24] sm:$0xf]
  %v64 = vld [vmem:[%s0 + $0x28] sm:$0xf]
  %v65 = vld [vmem:[%s0 + $0x2c] sm:$0xf]
  %v66 = vld [vmem:[%s0 + $0x30] sm:$0xf]
  %v67 = vld [vmem:[%s0 + $0x34] sm:$0xf]
  %v68 = vld [vmem:[%s0 + $0x38] sm:$0xf]
  %v69 = vld [vmem:[%s0 + $0x3c] sm:$0xf]
  %v70 = vld [vmem:[%s1] sm:$0xf]
  %v71 = vld [vmem:[%s1 + $0x4] sm:$0xf]
  %v72 = vld [vmem:[%s1 + $0x8] sm:$0xf]
  %v73 = vld [vmem:[%s1 + $0xc] sm:$0xf]
  %v74 = vld [vmem:[%s1 + $0x10] sm:$0xf]
  %v75 = vld [vmem:[%s1 + $0x14] sm:$0xf]
  %v76 = vld [vmem:[%s1 + $0x18] sm:$0xf]
  %v77 = vld [vmem:[%s1 + $0x1c] sm:$0xf]
  %v78 = vld [vmem:[%s1 + $0x20] sm:$0xf]
  %v79 = vld [vmem:[%s1 + $0x24] sm:$0xf]
  %v80 = vld [vmem:[%s1 + $0x28] sm:$0xf]
  %v81 = vld [vmem:[%s1 + $0x2c] sm:$0xf]
  %v82 = vld [vmem:[%s1 + $0x30] sm:$0xf]
  %v83 = vld [vmem:[%s1 + $0x34] sm:$0xf]
  %v84 = vld [vmem:[%s1 + $0x38] sm:$0xf]
  %v85 = vld [vmem:[%s1 + $0x3c] sm:$0xf]
  %v102 = vunpack.c.l.b16 %v54
  %v103 = vunpack.c.l.b16 %v55
  %v104 = vunpack.c.l.b16 %v56
  %v105 = vunpack.c.l.b16 %v57
  %v106 = vunpack.c.l.b16 %v58
  %v107 = vunpack.c.l.b16 %v59
  %v108 = vunpack.c.l.b16 %v60
  %v109 = vunpack.c.l.b16 %v61
  %v110 = vunpack.c.l.b16 %v62
  %v111 = vunpack.c.l.b16 %v63
  %v112 = vunpack.c.l.b16 %v64
  %v113 = vunpack.c.l.b16 %v65
  %v114 = vunpack.c.l.b16 %v66
  %v115 = vunpack.c.l.b16 %v67
  %v116 = vunpack.c.l.b16 %v68
  %v117 = vunpack.c.l.b16 %v69
  %v118 = vpack.c.b16 %v103, %v102
  %v119 = vpack.c.b16 %v105, %v104
  %v120 = vpack.c.b16 %v107, %v106
  %v121 = vpack.c.b16 %v109, %v108
  %v122 = vpack.c.b16 %v111, %v110
  %v123 = vpack.c.b16 %v113, %v112
  %v124 = vpack.c.b16 %v115, %v114
  %v125 = vpack.c.b16 %v117, %v116
  %v150 = vunpack.c.l.b16 %v70
  %v151 = vunpack.c.l.b16 %v71
  %v152 = vunpack.c.l.b16 %v72
  %v153 = vunpack.c.l.b16 %v73
  %v154 = vunpack.c.l.b16 %v74
  %v155 = vunpack.c.l.b16 %v75
  %v156 = vunpack.c.l.b16 %v76
  %v157 = vunpack.c.l.b16 %v77
  %v158 = vunpack.c.l.b16 %v78
  %v159 = vunpack.c.l.b16 %v79
  %v160 = vunpack.c.l.b16 %v80
  %v161 = vunpack.c.l.b16 %v81
  %v162 = vunpack.c.l.b16 %v82
  %v163 = vunpack.c.l.b16 %v83
  %v164 = vunpack.c.l.b16 %v84
  %v165 = vunpack.c.l.b16 %v85
  %v166 = vpack.c.b16 %v151, %v150
  %v167 = vpack.c.b16 %v153, %v152
  %v168 = vpack.c.b16 %v155, %v154
  %v169 = vpack.c.b16 %v157, %v156
  %v170 = vpack.c.b16 %v159, %v158
  %v171 = vpack.c.b16 %v161, %v160
  %v172 = vpack.c.b16 %v163, %v162
  %v173 = vpack.c.b16 %v165, %v164
  %182 = vmatpush.bf16.msra.mxu0 %v173
  %183 = vmatpush.bf16.msra.mxu0 %v172
  %184 = vmatpush.bf16.msra.mxu0 %v171
  %185 = vmatpush.bf16.msra.mxu0 %v170
  %186 = vmatpush.bf16.msra.mxu0 %v169
  %187 = vmatpush.bf16.msra.mxu0 %v168
  %188 = vmatpush.bf16.msra.mxu0 %v167
  %189 = vmatpush.bf16.msra.mxu0 %v166
  %190 = vmatmul.bf16.gmra.mxu0 %v118
  %v191 = vpop.f32.mrf.mxu0
  %v192 = vadd.f32 0.0, %v191
  %v193 = vpop.f32.mrf.mxu0
  %v194 = vadd.f32 0.0, %v193
  %195 = vmatmul.bf16.gmra.mxu0 %v119
  %v196 = vpop.f32.mrf.mxu0
  %v197 = vadd.f32 0.0, %v196
  %v198 = vpop.f32.mrf.mxu0
  %v199 = vadd.f32 0.0, %v198
  %200 = vmatmul.bf16.gmra.mxu0 %v120
  %v201 = vpop.f32.mrf.mxu0
  %v202 = vadd.f32 0.0, %v201
  %v203 = vpop.f32.mrf.mxu0
  %v204 = vadd.f32 0.0, %v203
  %205 = vmatmul.bf16.gmra.mxu0 %v121
  %v206 = vpop.f32.mrf.mxu0
  %v207 = vadd.f32 0.0, %v206
  %v208 = vpop.f32.mrf.mxu0
  %v209 = vadd.f32 0.0, %v208
  %210 = vmatmul.bf16.gmra.mxu0 %v122
  %v211 = vpop.f32.mrf.mxu0
  %v212 = vadd.f32 0.0, %v211
  %v213 = vpop.f32.mrf.mxu0
  %v214 = vadd.f32 0.0, %v213
  %215 = vmatmul.bf16.gmra.mxu0 %v123
  %v216 = vpop.f32.mrf.mxu0
  %v217 = vadd.f32 0.0, %v216
  %v218 = vpop.f32.mrf.mxu0
  %v219 = vadd.f32 0.0, %v218
  %220 = vmatmul.bf16.gmra.mxu0 %v124
  %v221 = vpop.f32.mrf.mxu0
  %v222 = vadd.f32 0.0, %v221
  %v223 = vpop.f32.mrf.mxu0
  %v224 = vadd.f32 0.0, %v223
  %225 = vmatmul.bf16.gmra.mxu0 %v125
  %v226 = vpop.f32.mrf.mxu0
  %v227 = vadd.f32 0.0, %v226
  %v228 = vpop.f32.mrf.mxu0
  %v229 = vadd.f32 0.0, %v228
  %230 = vdwg.mxu0
  %v231 = vadd.f32 %v38, %v192
  %v232 = vadd.f32 %v39, %v194
  %v233 = vadd.f32 %v40, %v197
  %v234 = vadd.f32 %v41, %v199
  %v235 = vadd.f32 %v42, %v202
  %v236 = vadd.f32 %v43, %v204
  %v237 = vadd.f32 %v44, %v207
  %v238 = vadd.f32 %v45, %v209
  %v239 = vadd.f32 %v46, %v212
  %v240 = vadd.f32 %v47, %v214
  %v241 = vadd.f32 %v48, %v217
  %v242 = vadd.f32 %v49, %v219
  %v243 = vadd.f32 %v50, %v222
  %v244 = vadd.f32 %v51, %v224
  %v245 = vadd.f32 %v52, %v227
  %v246 = vadd.f32 %v53, %v229
  %247 = vst [vmem:[%s3] sm:$0xff] %v231
  %248 = vst [vmem:[%s3 + $0x8] sm:$0xff] %v232
  %249 = vst [vmem:[%s3 + $0x10] sm:$0xff] %v233
  %250 = vst [vmem:[%s3 + $0x18] sm:$0xff] %v234
  %251 = vst [vmem:[%s3 + $0x20] sm:$0xff] %v235
  %252 = vst [vmem:[%s3 + $0x28] sm:$0xff] %v236
  %253 = vst [vmem:[%s3 + $0x30] sm:$0xff] %v237
  %254 = vst [vmem:[%s3 + $0x38] sm:$0xff] %v238
  %255 = vst [vmem:[%s3 + $0x40] sm:$0xff] %v239
  %256 = vst [vmem:[%s3 + $0x48] sm:$0xff] %v240
  %257 = vst [vmem:[%s3 + $0x50] sm:$0xff] %v241
  %258 = vst [vmem:[%s3 + $0x58] sm:$0xff] %v242
  %259 = vst [vmem:[%s3 + $0x60] sm:$0xff] %v243
  %260 = vst [vmem:[%s3 + $0x68] sm:$0xff] %v244
  %261 = vst [vmem:[%s3 + $0x70] sm:$0xff] %v245
  %262 = vst [vmem:[%s3 + $0x78] sm:$0xff] %v246
  // Predicated region
  $region18: #{graph_convolution.3} parent=0 // pred_check
    _
  $region19: #{graph_convolution.3} parent=0 // pred_check_branch
    %264 = sbr.rel (0) target = $region21
  $region20: #{graph_convolution.3} parent=0 // pred_region
    _
  $region21: #{graph_convolution.3} parent=0 // pred_fallthru
    _
  // Predicated region
  $region22: #{graph_convolution.3} parent=0 // pred_check
    _
  $region23: #{graph_convolution.3} parent=0 // pred_check_branch
    %266 = sbr.rel (0) target = $region25
  $region24: #{graph_convolution.3} parent=0 // pred_region
    _
  $region25: #{graph_convolution.3} parent=0 // pred_fallthru
    _

</llo_original>
